<compile_context>
chip_gen: v6e
topology: v6e:2x2x1
jax: 0.10.0
libtpu: 0.0.40
codegen_flags: <defaults>
</compile_context>

<pallas_src>
import functools

import jax
import jax.numpy as jnp
from jax.experimental import pallas as pl
from jax.experimental.pallas import tpu as pltpu


def _upconv_kernel(x_ref, w_ref, b_ref, o_ref, *, use_mxu):
    # x_ref: (1, Cin, tm)   activations, lane-dense over spatial positions
    # w_ref: (Nd, Cin)      Nd = Cout*4, row = (co*2 + kh)*2 + kw
    # b_ref: (Nd, 1)
    # o_ref: (1, Nd, tm)
    x = x_ref[0]          # (Cin, tm)
    w = w_ref[...]        # (Nd, Cin)
    if use_mxu:
        acc = jnp.dot(w, x, preferred_element_type=jnp.float32)
    else:
        # Tiny K: VPU broadcast-MAC over lane-dense tiles (MXU would be ~3% utilized).
        xf = x.astype(jnp.float32)
        wf = w.astype(jnp.float32)
        acc = wf[:, 0:1] * xf[0:1, :]
        for ci in range(1, w.shape[1]):
            acc = acc + wf[:, ci:ci + 1] * xf[ci:ci + 1, :]
    o_ref[0] = (acc + b_ref[...].astype(jnp.float32)).astype(o_ref.dtype)


def up_conv_forward(x_nchw, weight, bias, *, tm=512):
    """ConvTranspose2d(ch_in, ch_out, kernel_size=2, stride=2).

    x_nchw: (N, Cin, H, W)     PyTorch NCHW
    weight: (Cin, Cout, 2, 2)  PyTorch ConvTranspose2d weight layout
    bias:   (Cout,)
    returns (N, Cout, 2H, 2W)

    Pass bf16 activations/weights on v6e/v7x for 2x lower HBM/VMEM traffic; the
    kernel always accumulates in f32.
    """
    N, Cin, H, W = x_nchw.shape
    Cout = weight.shape[1]
    Nd = Cout * 4
    M = H * W

    # --- glue (cheap) ------------------------------------------------------
    # NCHW is contiguous as (N, Cin, H*W): free reshape, no transpose.
    x_r = x_nchw.reshape(N, Cin, M)
    # W[ci, co, kh, kw] -> (Nd, Cin), row index = (co*2 + kh)*2 + kw  (tiny)
    w_t = jnp.transpose(weight.reshape(Cin, Nd))
    # bias per co, repeated across the 4 kernel positions, as a column
    b_col = jnp.repeat(bias, 4).reshape(Nd, 1)

    # --- lane tile ----------------------------------------------------------
    # Whole spatial extent in one block when it fits (kills per-step overhead);
    # otherwise a multiple of 128 with a ragged (Pallas-masked) last block.
    if M <= tm:
        tm_eff = M
    else:
        tm_eff = max(128, (tm // 128) * 128)
    gm = pl.cdiv(M, tm_eff)

    use_mxu = Cin >= 32
    dtype = x_nchw.dtype
    itemsize = jnp.dtype(dtype).itemsize
    cost = pl.CostEstimate(
        flops=2 * N * M * Cin * Nd,
        transcendentals=0,
        bytes_accessed=(N * Cin * M + Nd * Cin + N * Nd * M) * itemsize,
    )

    # grid = (batch, spatial tiles): both parallel, so v7x's two TensorCores
    # always get >= 2 independent steps (N=2 here even when gm == 1).
    y = pl.pallas_call(
        functools.partial(_upconv_kernel, use_mxu=use_mxu),
        out_shape=jax.ShapeDtypeStruct((N, Nd, M), dtype),
        grid_spec=pltpu.PrefetchScalarGridSpec(
            num_scalar_prefetch=0,
            grid=(N, gm),
            in_specs=[
                pl.BlockSpec((1, Cin, tm_eff), lambda n, m: (n, 0, m)),
                pl.BlockSpec((Nd, Cin), lambda n, m: (0, 0)),
                pl.BlockSpec((Nd, 1), lambda n, m: (0, 0)),
            ],
            out_specs=pl.BlockSpec((1, Nd, tm_eff), lambda n, m: (n, 0, m)),
        ),
        compiler_params=pltpu.CompilerParams(
            dimension_semantics=("parallel", "parallel"),
        ),
        cost_estimate=cost,
    )(x_r, w_t, b_col)

    # --- glue: un-scatter 2x2 blocks back into NCHW --------------------------
    y = y.reshape(N, Cout, 2, 2, H, W)                 # (n, co, kh, kw, h, w)
    y = jnp.transpose(y, (0, 1, 4, 2, 5, 3))           # (n, co, h, kh, w, kw)
    return y.reshape(N, Cout, 2 * H, 2 * W)


def up_conv_reference(x_nchw, weight, bias):
    """Pure-JAX reference implementing the same ConvTranspose2d semantics."""
    N, Cin, H, W = x_nchw.shape
    Cout = weight.shape[1]
    y = jnp.einsum("nihw,iokl->nohwkl", x_nchw, weight)
    y = jnp.transpose(y, (0, 1, 2, 4, 3, 5)).reshape(N, Cout, 2 * H, 2 * W)
    return y + bias[None, :, None, None]


if __name__ == "__main__":
    key = jax.random.PRNGKey(0)
    kx, kw, kb = jax.random.split(key, 3)

    # Small shapes consistent with the module: batch=2, ch_in=4, ch_out=8, 16x16
    N, Cin, Cout, H, W = 2, 4, 8, 16, 16

    x = jax.random.normal(kx, (N, Cin, H, W), dtype=jnp.float32)
    weight = 0.1 * jax.random.normal(kw, (Cin, Cout, 2, 2), dtype=jnp.float32)
    bias = 0.05 * jax.random.normal(kb, (Cout,), dtype=jnp.float32)

    out = up_conv_forward(x, weight, bias)
    out = jax.block_until_ready(out)

    ref = up_conv_reference(x, weight, bias)
    assert out.shape == (N, Cout, 2 * H, 2 * W), out.shape
    assert jnp.allclose(out, ref, atol=1e-5, rtol=1e-5), "mismatch vs reference"

    print("KERNEL_OK")
</pallas_src>

<mosaic_0001>
module attributes {stable_mosaic.version = 11 : i64} {
  func.func @_upconv_kernel(%arg0: i32, %arg1: i32, %arg2: memref<1x4x256xf32, #tpu.memory_space<vmem>>, %arg3: memref<32x4xf32, #tpu.memory_space<vmem>>, %arg4: memref<32x1xf32, #tpu.memory_space<vmem>>, %arg5: memref<1x32x256xf32, #tpu.memory_space<vmem>>) attributes {dimension_semantics = [#tpu.dimension_semantics<parallel>, #tpu.dimension_semantics<parallel>], iteration_bounds = array<i64: 2, 1>, scalar_prefetch = 0 : i64, scratch_operands = 0 : i64, tpu.core_type = #tpu.core_type<tc>, window_params = [{transform_indices = @transform_0, window_bounds = array<i64: 1, 4, 256>}, {pipeline_mode = #tpu.pipeline_mode<synchronous>, transform_indices = @transform_1, window_bounds = array<i64: 32, 4>}, {pipeline_mode = #tpu.pipeline_mode<synchronous>, transform_indices = @transform_2, window_bounds = array<i64: 32, 1>}, {transform_indices = @transform_3, window_bounds = array<i64: 1, 32, 256>}]} {
    %c0 = arith.constant 0 : index
    %c0_0 = arith.constant 0 : index
    %c0_1 = arith.constant 0 : index
    %0 = vector.load %arg2[%c0, %c0_0, %c0_1] : memref<1x4x256xf32, #tpu.memory_space<vmem>>, vector<1x4x256xf32>
    %1 = vector.shape_cast %0 : vector<1x4x256xf32> to vector<4x256xf32>
    %c0_2 = arith.constant 0 : index
    %c0_3 = arith.constant 0 : index
    %2 = vector.load %arg3[%c0_2, %c0_3] : memref<32x4xf32, #tpu.memory_space<vmem>>, vector<32x4xf32>
    %3 = vector.extract_strided_slice %2 {offsets = [0, 0], sizes = [32, 1], strides = [1, 1]} : vector<32x4xf32> to vector<32x1xf32>
    %4 = vector.extract_strided_slice %1 {offsets = [0, 0], sizes = [1, 256], strides = [1, 1]} : vector<4x256xf32> to vector<1x256xf32>
    %5 = vector.broadcast %3 : vector<32x1xf32> to vector<32x256xf32>
    %6 = vector.broadcast %4 : vector<1x256xf32> to vector<32x256xf32>
    %7 = arith.mulf %5, %6 : vector<32x256xf32>
    %8 = vector.extract_strided_slice %2 {offsets = [0, 1], sizes = [32, 1], strides = [1, 1]} : vector<32x4xf32> to vector<32x1xf32>
    %9 = vector.extract_strided_slice %1 {offsets = [1, 0], sizes = [1, 256], strides = [1, 1]} : vector<4x256xf32> to vector<1x256xf32>
    %10 = vector.broadcast %8 : vector<32x1xf32> to vector<32x256xf32>
    %11 = vector.broadcast %9 : vector<1x256xf32> to vector<32x256xf32>
    %12 = arith.mulf %10, %11 : vector<32x256xf32>
    %13 = arith.addf %7, %12 : vector<32x256xf32>
    %14 = vector.extract_strided_slice %2 {offsets = [0, 2], sizes = [32, 1], strides = [1, 1]} : vector<32x4xf32> to vector<32x1xf32>
    %15 = vector.extract_strided_slice %1 {offsets = [2, 0], sizes = [1, 256], strides = [1, 1]} : vector<4x256xf32> to vector<1x256xf32>
    %16 = vector.broadcast %14 : vector<32x1xf32> to vector<32x256xf32>
    %17 = vector.broadcast %15 : vector<1x256xf32> to vector<32x256xf32>
    %18 = arith.mulf %16, %17 : vector<32x256xf32>
    %19 = arith.addf %13, %18 : vector<32x256xf32>
    %20 = vector.extract_strided_slice %2 {offsets = [0, 3], sizes = [32, 1], strides = [1, 1]} : vector<32x4xf32> to vector<32x1xf32>
    %21 = vector.extract_strided_slice %1 {offsets = [3, 0], sizes = [1, 256], strides = [1, 1]} : vector<4x256xf32> to vector<1x256xf32>
    %22 = vector.broadcast %20 : vector<32x1xf32> to vector<32x256xf32>
    %23 = vector.broadcast %21 : vector<1x256xf32> to vector<32x256xf32>
    %24 = arith.mulf %22, %23 : vector<32x256xf32>
    %25 = arith.addf %19, %24 : vector<32x256xf32>
    %c0_4 = arith.constant 0 : index
    %c0_5 = arith.constant 0 : index
    %26 = vector.load %arg4[%c0_4, %c0_5] : memref<32x1xf32, #tpu.memory_space<vmem>>, vector<32x1xf32>
    %27 = vector.broadcast %26 : vector<32x1xf32> to vector<32x256xf32>
    %28 = arith.addf %25, %27 : vector<32x256xf32>
    %c0_6 = arith.constant 0 : index
    %c0_7 = arith.constant 0 : index
    %c0_8 = arith.constant 0 : index
    %29 = vector.load %arg5[%c0_6, %c0_7, %c0_8] : memref<1x32x256xf32, #tpu.memory_space<vmem>>, vector<1x32x256xf32>
    %30 = vector.shape_cast %29 : vector<1x32x256xf32> to vector<32x256xf32>
    %31 = vector.shape_cast %28 : vector<32x256xf32> to vector<1x32x256xf32>
    tpu.vector_store %arg5[%c0_6, %c0_7, %c0_8], %31 {strides = array<i32>} : memref<1x32x256xf32, #tpu.memory_space<vmem>>, vector<1x32x256xf32>,
    return
  }
  func.func @transform_0(%arg0: i32, %arg1: i32) -> (i32, i32, i32) {
    %c0_i32 = arith.constant 0 : i32
    %c0_i32_0 = arith.constant 0 : i32
    return %arg0, %c0_i32, %arg1 : i32, i32, i32
  }
  func.func @transform_1(%arg0: i32, %arg1: i32) -> (i32, i32) {
    %c0_i32 = arith.constant 0 : i32
    %c0_i32_0 = arith.constant 0 : i32
    %c0_i32_1 = arith.constant 0 : i32
    return %c0_i32, %c0_i32_0 : i32, i32
  }
  func.func @transform_2(%arg0: i32, %arg1: i32) -> (i32, i32) {
    %c0_i32 = arith.constant 0 : i32
    %c0_i32_0 = arith.constant 0 : i32
    %c0_i32_1 = arith.constant 0 : i32
    return %c0_i32, %c0_i32_0 : i32, i32
  }
  func.func @transform_3(%arg0: i32, %arg1: i32) -> (i32, i32, i32) {
    %c0_i32 = arith.constant 0 : i32
    %c0_i32_0 = arith.constant 0 : i32
    return %arg0, %c0_i32, %arg1 : i32, i32, i32
  }
}

</mosaic_0001>

<llo_original>
// kernel: tpu_custom_call.1
$region0: #{tpu_custom_call.1}
  #allocation0 [shape = 'u32[]', space=smem, size = 0x4, offset = 0x4, fixed_abs, tag = 'smem constant byte address 0x4 - core index']
  #allocation1 [shape = 'u32[144,128]{1,0:T(1,128)}', space=vmem, size = 0x12000, scoped, tag = 'internal scratch']
  %s0 = inlined_call_operand.vmem [shape: f32[2,4,256], index: 0, kind: input, shape index: {}]
  %s1 = inlined_call_operand.vmem [shape: f32[32,4], index: 1, kind: input, shape index: {}]
  %s2 = inlined_call_operand.vmem [shape: f32[32,1], index: 2, kind: input, shape index: {}]
  %s3 = inlined_call_operand.hbm [shape: f32[2,32,256], index: 3, kind: output, shape index: {}]
  %s4 = sld [smem:[#allocation0]]
  $region45: #{tpu_custom_call.1} parent=0
    _
  %s6 = ssub.s32 1, %s4
  %s7 = scalar_select 0, %s6, %s4
  $region1: #{tpu_custom_call.1} parent=0
    #allocation2 [shape = 'u8[65536]{0}', space=vmem, size = 0x10000, scoped, tag = 'output window, operand 0']
    #allocation3 [shape = 's32[2]{0}', space=sflag, size = 0x8, scoped, tag = 'scoped memory for tpu_custom_call.1']
    %8 = vsyncpa [#allocation3], 0
    %s9 = scalar_lea.sflag [#allocation3], 1
    %10 = vsyncpa %s9, 0
    loop: start=0, step=1, limit=4
    $region2: #{tpu_custom_call.1} parent=1 // loop_pre_header
      _
    $region3: #{tpu_custom_call.1} parent=1 // loop_header
      %s12 = sphi 0, %s16
      %p13 = scmp.ge.s32.totalorder %s12, 4
      %s19 = sphi 0, %s31
      %s20 = sphi 0, %s27
      %s21 = sphi 0, %s19
      %s22 = sphi 0, %s20
      %s23 = sphi 0, %s21
      %s24 = sphi 0, %s22
      %s36 = sphi 0, %s38
      %s39 = sphi 0, %s36
      %s40 = sphi 0, %s39
      %s56 = sphi 0, %s40
      %s60 = sphi 0, %s60
      %s62 = sphi 0, %s60
      %s63 = sphi 0, %s62
      %s77 = sphi 0, %s63
      %s81 = sphi 0, %s81
      %s83 = sphi 0, %s81
      %s84 = sphi 0, %s83
      %s98 = sphi 0, %s84
      %s106 = sphi 0, %s108
      %s109 = sphi 0, %s106
      %s110 = sphi 0, %s109
      %s126 = sphi 0, %s110
    $region4: #{tpu_custom_call.1} parent=1 // loop_header_branch
      %15 = sbr.rel (%p13) target = $region8
    $region5: #{tpu_custom_call.1} parent=1 // loop_body
      %s17 = ssub.s32 %s12, 1
      %s18 = ssub.s32 %s12, 2
      %s25 = sadd.s32 1, %s20
      %p26 = scmp.ge.s32.totalorder %s25, 1
      %s27 = scalar_select %p26, 0, %s25
      %s28 = sadd.s32 1, %s19
      %s29 = scalar_select %p26, %s28, %s19
      %p30 = scmp.ge.s32.totalorder %s29, 2
      %s31 = scalar_select %p30, 0, %s29
      %s32 = ssub.s32 %s19, %s31
      %s33 = ssub.s32 %s20, %s27
      %s34 = sor.u32 %s32, %s33
      %p35 = scmp.eq.s32.totalorder %s34, 0
      %s37 = sadd.s32 %s36, 1
      %s38 = scalar_select %p35, %s36, %s37
      %p41 = pneg %p35
      %p42 = scmp.eq.s32.totalorder %s12, 1
      %p43 = por %p41, %p42
      %p44 = scmp.ne.s32.totalorder %s36, %s39
      %p45 = scmp.eq.s32.totalorder %s12, 0
      %p46 = por %p44, %p45
      %p47 = scmp.ne.s32.totalorder %s36, %s39
      %p48 = scmp.eq.s32.totalorder %s17, 1
      %p49 = por %p47, %p48
      %p50 = scmp.ne.s32.totalorder %s39, %s40
      %p51 = scmp.eq.s32.totalorder %s17, 0
      %p52 = por %p50, %p51
      %p53 = scmp.ne.s32.totalorder %s39, %s40
      %p54 = scmp.eq.s32.totalorder %s18, 1
      %p55 = por %p53, %p54
      %p57 = scmp.ne.s32.totalorder %s40, %s56
      %p58 = scmp.eq.s32.totalorder %s18, 0
      %p59 = por %p57, %p58
      %s61 = sadd.s32 %s60, 1
      %p64 = scmp.eq.s32.totalorder %s12, 1
      %p65 = scmp.ne.s32.totalorder %s60, %s62
      %p66 = scmp.eq.s32.totalorder %s12, 0
      %p67 = por %p65, %p66
      %p68 = scmp.ne.s32.totalorder %s60, %s62
      %p69 = scmp.eq.s32.totalorder %s17, 1
      %p70 = por %p68, %p69
      %p71 = scmp.ne.s32.totalorder %s62, %s63
      %p72 = scmp.eq.s32.totalorder %s17, 0
      %p73 = por %p71, %p72
      %p74 = scmp.ne.s32.totalorder %s62, %s63
      %p75 = scmp.eq.s32.totalorder %s18, 1
      %p76 = por %p74, %p75
      %p78 = scmp.ne.s32.totalorder %s63, %s77
      %p79 = scmp.eq.s32.totalorder %s18, 0
      %p80 = por %p78, %p79
      %s82 = sadd.s32 %s81, 1
      %p85 = scmp.eq.s32.totalorder %s12, 1
      %p86 = scmp.ne.s32.totalorder %s81, %s83
      %p87 = scmp.eq.s32.totalorder %s12, 0
      %p88 = por %p86, %p87
      %p89 = scmp.ne.s32.totalorder %s81, %s83
      %p90 = scmp.eq.s32.totalorder %s17, 1
      %p91 = por %p89, %p90
      %p92 = scmp.ne.s32.totalorder %s83, %s84
      %p93 = scmp.eq.s32.totalorder %s17, 0
      %p94 = por %p92, %p93
      %p95 = scmp.ne.s32.totalorder %s83, %s84
      %p96 = scmp.eq.s32.totalorder %s18, 1
      %p97 = por %p95, %p96
      %p99 = scmp.ne.s32.totalorder %s84, %s98
      %p100 = scmp.eq.s32.totalorder %s18, 0
      %p101 = por %p99, %p100
      %s102 = ssub.s32 %s19, %s31
      %s103 = ssub.s32 %s20, %s27
      %s104 = sor.u32 %s102, %s103
      %p105 = scmp.eq.s32.totalorder %s104, 0
      %s107 = sadd.s32 %s106, 1
      %s108 = scalar_select %p105, %s106, %s107
      %p111 = pneg %p105
      %p112 = scmp.eq.s32.totalorder %s12, 1
      %p113 = por %p111, %p112
      %p114 = scmp.ne.s32.totalorder %s106, %s109
      %p115 = scmp.eq.s32.totalorder %s12, 0
      %p116 = por %p114, %p115
      %p117 = scmp.ne.s32.totalorder %s106, %s109
      %p118 = scmp.eq.s32.totalorder %s17, 1
      %p119 = por %p117, %p118
      %p120 = scmp.ne.s32.totalorder %s109, %s110
      %p121 = scmp.eq.s32.totalorder %s17, 0
      %p122 = por %p120, %p121
      %p123 = scmp.ne.s32.totalorder %s109, %s110
      %p124 = scmp.eq.s32.totalorder %s18, 1
      %p125 = por %p123, %p124
      %p127 = scmp.ne.s32.totalorder %s110, %s126
      %p128 = scmp.eq.s32.totalorder %s18, 0
      %p129 = por %p127, %p128
      %p130 = scmp.le.s32.totalorder 1, %s12
      %p131 = scmp.lt.s32.totalorder %s12, 3
      %p132 = pnand %p130, %p131
      %p133 = pneg %p132
      // Predicated region
      $region9: #{tpu_custom_call.1} parent=5 // pred_check
        _
      $region10: #{tpu_custom_call.1} parent=5 // pred_check_branch
        %135 = sbr.rel (%p132) target = $region12
      $region11: #{tpu_custom_call.1} parent=5 // pred_region
        %s136 = ssub.s32 %s12, 1
        // Predicated region
        $region13: #{tpu_custom_call.1} parent=11 // pred_check
          %p137 = pneg %p73
        $region14: #{tpu_custom_call.1} parent=11 // pred_check_branch
          %139 = sbr.rel (%p137) target = $region16
        $region15: #{tpu_custom_call.1} parent=11 // pred_region
          _
        $region16: #{tpu_custom_call.1} parent=11 // pred_fallthru
          _
        // Predicated region
        $region17: #{tpu_custom_call.1} parent=11 // pred_check
          %p140 = pneg %p94
        $region18: #{tpu_custom_call.1} parent=11 // pred_check_branch
          %142 = sbr.rel (%p140) target = $region20
        $region19: #{tpu_custom_call.1} parent=11 // pred_region
          _
        $region20: #{tpu_custom_call.1} parent=11 // pred_fallthru
          _
      $region12: #{tpu_custom_call.1} parent=5 // pred_fallthru
        _
      %p143 = scmp.lt.s32.totalorder %s12, 2
      // Predicated region
      $region21: #{tpu_custom_call.1} parent=5 // pred_check
        %p144 = pneg %p143
      $region22: #{tpu_custom_call.1} parent=5 // pred_check_branch
        %146 = sbr.rel (%p144) target = $region24
      $region23: #{tpu_custom_call.1} parent=5 // pred_region
        // Predicated region
        $region25: #{tpu_custom_call.1} parent=23 // pred_check
          %p147 = pneg %p46
        $region26: #{tpu_custom_call.1} parent=23 // pred_check_branch
          %149 = sbr.rel (%p147) target = $region28
        $region27: #{tpu_custom_call.1} parent=23 // pred_region
          %s150 = smul.u32 2, %s20
          %p151 = scmp.lt.s32.totalorder %s19, 1
          %s152 = scalar_select %p151, %s19, 1
          %p153 = scmp.lt.s32.totalorder %s150, 1
          %s154 = scalar_select %p153, %s150, 1
          %s155 = smul.addr %s152, 2
          %s156 = sadd.s32 %s154, %s155
          %s157 = smul.addr %s156, 4
          %s158 = scalar_lea.vmem %s0, %s157
          %s159 = smul.u32 2, %s20
        $region28: #{tpu_custom_call.1} parent=23 // pred_fallthru
          _
      $region24: #{tpu_custom_call.1} parent=5 // pred_fallthru
        _
      %p160 = scmp.le.s32.totalorder 1, %s12
      %p161 = scmp.lt.s32.totalorder %s12, 3
      %p162 = pnand %p160, %p161
      %p163 = pneg %p162
      // Predicated region
      $region29: #{tpu_custom_call.1} parent=5 // pred_check
        _
      $region30: #{tpu_custom_call.1} parent=5 // pred_check_branch
        %165 = sbr.rel (%p162) target = $region32
      $region31: #{tpu_custom_call.1} parent=5 // pred_region
        %s166 = ssub.s32 %s12, 1
        %s167 = smul.u32 2, %s22
        %p168 = scmp.lt.s32.totalorder %s21, 1
        %s169 = scalar_select %p168, %s21, 1
        %p170 = scmp.lt.s32.totalorder %s167, 1
        %s171 = scalar_select %p170, %s167, 1
        %s172 = smul.addr %s169, 2
        %s173 = sadd.s32 %s171, %s172
        %s174 = smul.addr %s173, 4
        %s175 = scalar_lea.vmem %s0, %s174
        %p176 = pneg %p52
        %p177 = pneg %p49
        %p178 = pneg %p73
        %p179 = pneg %p70
        %p180 = pneg %p94
        %p181 = pneg %p91
        %p182 = pneg %p122
        %p183 = pneg %p119
        %s184 = sand.u32 %s109, 1
        %s185 = scalar_lea.sflag [#allocation3], %s184
        %s186 = sand.u32 %s109, 1
        %s187 = smul.addr %s186, 64
        %s188 = scalar_lea.vmem [#allocation2], %s187
        %s189 = smul.u32 2, %s22
        %p190 = scmp.lt.s32.totalorder %s21, 1
        %s191 = scalar_select %p190, %s21, 1
        %p192 = scmp.lt.s32.totalorder %s189, 1
        %s193 = scalar_select %p192, %s189, 1
        %s194 = smul.addr %s191, 2
        %s195 = sadd.s32 %s193, %s194
        %s196 = smul.addr %s195, 4
        %s197 = scalar_lea.vmem %s0, %s196
        %s198 = smul.u32 2, %s22
        %s199 = smul.u32 2, %s22
        %v200 = vld [vmem:[%s197] sm:$0xff]
        %v201 = vld [vmem:[%s1] sm:$0xff]
        %v202 = vld [vmem:[%s1 + $0x8] sm:$0xff]
        %v203 = vld [vmem:[%s1 + $0x10] sm:$0xff]
        %v204 = vld [vmem:[%s1 + $0x18] sm:$0xff]
        %206 = vset.pattern.permute.xlu0 0
        %207 = vperm.xlu0 %206, %v201
        %v208 = vpop.permute.xlu0 %207
        %211 = vset.pattern.permute.xlu0 0
        %212 = vperm.xlu0 %211, %v202
        %v213 = vpop.permute.xlu0 %212
        %216 = vset.pattern.permute.xlu0 0
        %217 = vperm.xlu0 %216, %v203
        %v218 = vpop.permute.xlu0 %217
        %221 = vset.pattern.permute.xlu0 0
        %222 = vperm.xlu0 %221, %v204
        %v223 = vpop.permute.xlu0 %222
        %v226 = vlaneseq
        %v227 = vshrl.u32 %v226, 7
        %v228 = vsub.s32 0, %v227
        %v229 = vrot.slane %v200, %v228
        %v230 = vlaneseq
        %v231 = vshrl.u32 %v230, 7
        %v232 = vsub.s32 4, %v231
        %v233 = vrot.slane %v200, %v232
        %v236 = vlaneseq
        %v237 = vshrl.u32 %v236, 7
        %v238 = vsub.s32 0, %v237
        %v239 = vrot.slane %v229, %v238
        %v240 = vlaneseq
        %v241 = vshrl.u32 %v240, 7
        %v242 = vsub.s32 0, %v241
        %v243 = vrot.slane %v233, %v242
        %v244 = vmul.f32 %v208, %v239
        %v245 = vmul.f32 %v208, %v243
        %v246 = vmul.f32 %v213, %v239
        %v247 = vmul.f32 %v213, %v243
        %v248 = vmul.f32 %v218, %v239
        %v249 = vmul.f32 %v218, %v243
        %v250 = vmul.f32 %v223, %v239
        %v251 = vmul.f32 %v223, %v243
        %252 = vset.pattern.permute.xlu0 1
        %253 = vperm.xlu0 %252, %v201
        %v254 = vpop.permute.xlu0 %253
        %256 = vset.pattern.permute.xlu0 1
        %257 = vperm.xlu0 %256, %v202
        %v258 = vpop.permute.xlu0 %257
        %260 = vset.pattern.permute.xlu0 1
        %261 = vperm.xlu0 %260, %v203
        %v262 = vpop.permute.xlu0 %261
        %264 = vset.pattern.permute.xlu0 1
        %265 = vperm.xlu0 %264, %v204
        %v266 = vpop.permute.xlu0 %265
        %v268 = vlaneseq
        %v269 = vshrl.u32 %v268, 7
        %v270 = vsub.s32 1, %v269
        %v271 = vrot.slane %v200, %v270
        %v272 = vlaneseq
        %v273 = vshrl.u32 %v272, 7
        %v274 = vsub.s32 5, %v273
        %v275 = vrot.slane %v200, %v274
        %v278 = vlaneseq
        %v279 = vshrl.u32 %v278, 7
        %v280 = vsub.s32 1, %v279
        %v281 = vrot.slane %v271, %v280
        %v282 = vlaneseq
        %v283 = vshrl.u32 %v282, 7
        %v284 = vsub.s32 1, %v283
        %v285 = vrot.slane %v275, %v284
        %v286 = vmul.f32 %v254, %v281
        %v287 = vmul.f32 %v254, %v285
        %v288 = vmul.f32 %v258, %v281
        %v289 = vmul.f32 %v258, %v285
        %v290 = vmul.f32 %v262, %v281
        %v291 = vmul.f32 %v262, %v285
        %v292 = vmul.f32 %v266, %v281
        %v293 = vmul.f32 %v266, %v285
        %v294 = vadd.f32 %v244, %v286
        %v295 = vadd.f32 %v245, %v287
        %v296 = vadd.f32 %v246, %v288
        %v297 = vadd.f32 %v247, %v289
        %v298 = vadd.f32 %v248, %v290
        %v299 = vadd.f32 %v249, %v291
        %v300 = vadd.f32 %v250, %v292
        %v301 = vadd.f32 %v251, %v293
        %302 = vset.pattern.permute.xlu0 2
        %303 = vperm.xlu0 %302, %v201
        %v304 = vpop.permute.xlu0 %303
        %306 = vset.pattern.permute.xlu0 2
        %307 = vperm.xlu0 %306, %v202
        %v308 = vpop.permute.xlu0 %307
        %310 = vset.pattern.permute.xlu0 2
        %311 = vperm.xlu0 %310, %v203
        %v312 = vpop.permute.xlu0 %311
        %314 = vset.pattern.permute.xlu0 2
        %315 = vperm.xlu0 %314, %v204
        %v316 = vpop.permute.xlu0 %315
        %v318 = vlaneseq
        %v319 = vshrl.u32 %v318, 7
        %v320 = vsub.s32 2, %v319
        %v321 = vrot.slane %v200, %v320
        %v322 = vlaneseq
        %v323 = vshrl.u32 %v322, 7
        %v324 = vsub.s32 6, %v323
        %v325 = vrot.slane %v200, %v324
        %v328 = vlaneseq
        %v329 = vshrl.u32 %v328, 7
        %v330 = vsub.s32 2, %v329
        %v331 = vrot.slane %v321, %v330
        %v332 = vlaneseq
        %v333 = vshrl.u32 %v332, 7
        %v334 = vsub.s32 2, %v333
        %v335 = vrot.slane %v325, %v334
        %v336 = vmul.f32 %v304, %v331
        %v337 = vmul.f32 %v304, %v335
        %v338 = vmul.f32 %v308, %v331
        %v339 = vmul.f32 %v308, %v335
        %v340 = vmul.f32 %v312, %v331
        %v341 = vmul.f32 %v312, %v335
        %v342 = vmul.f32 %v316, %v331
        %v343 = vmul.f32 %v316, %v335
        %v344 = vadd.f32 %v294, %v336
        %v345 = vadd.f32 %v295, %v337
        %v346 = vadd.f32 %v296, %v338
        %v347 = vadd.f32 %v297, %v339
        %v348 = vadd.f32 %v298, %v340
        %v349 = vadd.f32 %v299, %v341
        %v350 = vadd.f32 %v300, %v342
        %v351 = vadd.f32 %v301, %v343
        %352 = vset.pattern.permute.xlu0 3
        %353 = vperm.xlu0 %352, %v201
        %v354 = vpop.permute.xlu0 %353
        %356 = vset.pattern.permute.xlu0 3
        %357 = vperm.xlu0 %356, %v202
        %v358 = vpop.permute.xlu0 %357
        %360 = vset.pattern.permute.xlu0 3
        %361 = vperm.xlu0 %360, %v203
        %v362 = vpop.permute.xlu0 %361
        %364 = vset.pattern.permute.xlu0 3
        %365 = vperm.xlu0 %364, %v204
        %v366 = vpop.permute.xlu0 %365
        %v368 = vlaneseq
        %v369 = vshrl.u32 %v368, 7
        %v370 = vsub.s32 3, %v369
        %v371 = vrot.slane %v200, %v370
        %v372 = vlaneseq
        %v373 = vshrl.u32 %v372, 7
        %v374 = vsub.s32 7, %v373
        %v375 = vrot.slane %v200, %v374
        %v378 = vlaneseq
        %v379 = vshrl.u32 %v378, 7
        %v380 = vsub.s32 3, %v379
        %v381 = vrot.slane %v371, %v380
        %v382 = vlaneseq
        %v383 = vshrl.u32 %v382, 7
        %v384 = vsub.s32 3, %v383
        %v385 = vrot.slane %v375, %v384
        %v386 = vmul.f32 %v354, %v381
        %v387 = vmul.f32 %v354, %v385
        %v388 = vmul.f32 %v358, %v381
        %v389 = vmul.f32 %v358, %v385
        %v390 = vmul.f32 %v362, %v381
        %v391 = vmul.f32 %v362, %v385
        %v392 = vmul.f32 %v366, %v381
        %v393 = vmul.f32 %v366, %v385
        %v394 = vadd.f32 %v344, %v386
        %v395 = vadd.f32 %v345, %v387
        %v396 = vadd.f32 %v346, %v388
        %v397 = vadd.f32 %v347, %v389
        %v398 = vadd.f32 %v348, %v390
        %v399 = vadd.f32 %v349, %v391
        %v400 = vadd.f32 %v350, %v392
        %v401 = vadd.f32 %v351, %v393
        %v402 = vld [vmem:[%s2] sm:$0xff]
        %v403 = vld [vmem:[%s2 + $0x8] sm:$0xff]
        %v404 = vld [vmem:[%s2 + $0x10] sm:$0xff]
        %v405 = vld [vmem:[%s2 + $0x18] sm:$0xff]
        %407 = vset.pattern.permute.xlu0 0
        %408 = vperm.xlu0 %407, %v402
        %v409 = vpop.permute.xlu0 %408
        %412 = vset.pattern.permute.xlu0 0
        %413 = vperm.xlu0 %412, %v403
        %v414 = vpop.permute.xlu0 %413
        %417 = vset.pattern.permute.xlu0 0
        %418 = vperm.xlu0 %417, %v404
        %v419 = vpop.permute.xlu0 %418
        %422 = vset.pattern.permute.xlu0 0
        %423 = vperm.xlu0 %422, %v405
        %v424 = vpop.permute.xlu0 %423
        %v426 = vadd.f32 %v394, %v409
        %v427 = vadd.f32 %v395, %v409
        %v428 = vadd.f32 %v396, %v414
        %v429 = vadd.f32 %v397, %v414
        %v430 = vadd.f32 %v398, %v419
        %v431 = vadd.f32 %v399, %v419
        %v432 = vadd.f32 %v400, %v424
        %v433 = vadd.f32 %v401, %v424
        %434 = vst [vmem:[%s188] sm:$0xff] %v426
        %435 = vst [vmem:[%s188 + $0x8] sm:$0xff] %v427
        %436 = vst [vmem:[%s188 + $0x10] sm:$0xff] %v428
        %437 = vst [vmem:[%s188 + $0x18] sm:$0xff] %v429
        %438 = vst [vmem:[%s188 + $0x20] sm:$0xff] %v430
        %439 = vst [vmem:[%s188 + $0x28] sm:$0xff] %v431
        %440 = vst [vmem:[%s188 + $0x30] sm:$0xff] %v432
        %441 = vst [vmem:[%s188 + $0x38] sm:$0xff] %v433
        %s442 = sand.u32 %s109, 1
        %s443 = scalar_lea.sflag [#allocation3], %s442
        %s444 = sand.u32 %s109, 1
        %s445 = smul.addr %s444, 64
        %s446 = scalar_lea.vmem [#allocation2], %s445
        // Predicated region
        $region33: #{tpu_custom_call.1} parent=31 // pred_check
          %p447 = pneg %p119
        $region34: #{tpu_custom_call.1} parent=31 // pred_check_branch
          %449 = sbr.rel (%p447) target = $region36
        $region35: #{tpu_custom_call.1} parent=31 // pred_region
          %s450 = smul.u32 2, %s22
          %s452 = ssub.s32 1024, 1024
          %453 = vsyncadd %s443, %s452
          %s454 = smul.addr %s21, 8
          %s455 = sadd.s32 %s450, %s454
          %s456 = smul.addr %s455, 128
          %s457 = scalar_lea.hbm %s3, %s456
          %s458 = sshll.u32 %s446, 4
          %s459 = int_to_ptr.vmem [resolvable:$true] %s458
          %464 = dma.vmem_to_hbm [thread:$0]  %s459, 1024, %s457, %s443, 256, 256, 16
        $region36: #{tpu_custom_call.1} parent=31 // pred_fallthru
          _
      $region32: #{tpu_custom_call.1} parent=5 // pred_fallthru
        _
      %p465 = scmp.le.s32.totalorder 2, %s12
      // Predicated region
      $region37: #{tpu_custom_call.1} parent=5 // pred_check
        %p466 = pneg %p465
      $region38: #{tpu_custom_call.1} parent=5 // pred_check_branch
        %468 = sbr.rel (%p466) target = $region40
      $region39: #{tpu_custom_call.1} parent=5 // pred_region
        %s469 = ssub.s32 %s12, 2
        // Predicated region
        $region41: #{tpu_custom_call.1} parent=39 // pred_check
          %p470 = pneg %p125
        $region42: #{tpu_custom_call.1} parent=39 // pred_check_branch
          %472 = sbr.rel (%p470) target = $region44
        $region43: #{tpu_custom_call.1} parent=39 // pred_region
          %s473 = sand.u32 %s110, 1
          %s474 = scalar_lea.sflag [#allocation3], %s473
          %s475 = sand.u32 %s110, 1
          %s476 = smul.addr %s475, 64
          %s477 = scalar_lea.vmem [#allocation2], %s476
          %478 = dma.done %s474, 1024
        $region44: #{tpu_custom_call.1} parent=39 // pred_fallthru
          _
      $region40: #{tpu_custom_call.1} parent=5 // pred_fallthru
        _
    $region6: #{tpu_custom_call.1} parent=1 // loop_footer
      %s16 = sadd.s32 1, %s12
    $region7: #{tpu_custom_call.1} parent=1 // loop_footer_branch
      %11 = sbr.rel target = $region3
    $region8: #{tpu_custom_call.1} parent=1 // loop_exit
      _
    %479 = vsyncpa [#allocation3], 1
    %s480 = scalar_lea.sflag [#allocation3], 1
    %481 = vsyncpa %s480, 1

</llo_original>
